<compile_context>
chip_gen: v7x
topology: tpu7x:2x2x1
jax: 0.10.0
libtpu: 0.0.40
codegen_flags: <defaults>
</compile_context>

<pallas_src>
import math

import jax
import jax.numpy as jnp
from jax.experimental import pallas as pl
from jax.experimental.pallas import tpu as pltpu


_LANE = 128
_SUBLANE = 8
# Per-block VMEM budget.  Double buffering keeps 2 * (in + out) blocks live,
# so a 4 MiB block -> ~16 MiB live, well under the 48 MiB cap below.
_PER_TILE_BUDGET_BYTES = 4 * 1024 * 1024
# Target minimum HBM burst length per DMA row (dtype-aware floor on tile dims).
_MIN_BURST_BYTES = 2048
# Explicit scoped-VMEM request cap: stays well under v7x's 64 MiB/TC physical
# VMEM (v5e/v6e have 128 MiB physical, so this is safe everywhere).
_VMEM_LIMIT_CAP = 48 * 1024 * 1024
# Max batches packed into one grid step on the small-slab path (bounds the
# statically unrolled per-slice transpose loop).
_MAX_PACK = 16
# Aim for at least this many grid steps so the DMA pipeline has read/compute/
# write overlap and v7x's two TensorCores both get work.
_TARGET_STEPS = 4


def _round_up(v: int, m: int) -> int:
    return ((v + m - 1) // m) * m


def _padded_block_bytes(shape, itemsize: int) -> int:
    """VMEM footprint of one block buffer: last two dims pad to (8, 128)."""
    *lead, s, l = shape
    elems = 1
    for d in lead:
        elems *= int(d)
    elems *= _round_up(int(s), _SUBLANE) * _round_up(int(l), _LANE)
    return elems * itemsize


def _choose_tile(T: int, C: int, itemsize: int, budget: int):
    """Pick (tT, tC) for the tiled path.

    Balanced tiles keep both the input read burst (tC*itemsize) and the output
    write burst (tT*itemsize) long; a dtype-aware floor keeps sub-32-bit dtypes
    from degenerating into short bursts.
    """
    max_elems = max(budget // itemsize, _LANE * _LANE)
    min_burst = _round_up(max(_MIN_BURST_BYTES // itemsize, _LANE), _LANE)
    T_pad = _round_up(T, _LANE)
    C_pad = _round_up(C, _LANE)

    # Square-ish starting point (128-multiple), floored at the min-burst size.
    side = max(_LANE, (int(max_elems ** 0.5) // _LANE) * _LANE)
    tT = min(T_pad, max(side, min_burst))
    tC = min(C_pad, max(side, min_burst))

    # If one axis is fully covered by its tile, spend leftover budget on the
    # other axis: a fully-covered axis means that side's HBM access is
    # contiguous regardless, so long bursts are preserved on both sides.
    if tT >= T_pad and tC < C_pad:
        tC = min(C_pad, max(tC, (max_elems // max(tT, 1)) // _LANE * _LANE))
    elif tC >= C_pad and tT < T_pad:
        tT = min(T_pad, max(tT, (max_elems // max(tC, 1)) // _LANE * _LANE))

    # Clamp to exact full dims (full-dim blocks are always layout-legal and
    # avoid a pure-padding edge tile).
    return min(tT, T), min(tC, C)


# ---------------------------------------------------------------------------
# Kernels
# ---------------------------------------------------------------------------

def _transpose_tile_kernel(x_ref, o_ref):
    # x_ref: (tT, tC) tile in VMEM; o_ref: (tC, tT) tile in VMEM.
    # Block-level permutation is handled by the index_maps; only the
    # intra-tile transpose hits the XLU.
    o_ref[...] = x_ref[...].T


def _make_packed_kernel(nb: int):
    def kernel(x_ref, o_ref):
        # x_ref: (nb, T, C); o_ref: (nb, C, T).  nb is small and static, so a
        # fully unrolled loop of well-supported 2-D XLU transposes.  On a
        # ragged last block the out-of-bounds slices read/write only the VMEM
        # padding, which is never DMA'd back.
        for j in range(nb):
            o_ref[j] = x_ref[j].T
    return kernel


# ---------------------------------------------------------------------------
# Wrapper
# ---------------------------------------------------------------------------

def transpose_pallas(x: jax.Array, dim0: int, dim1: int,
                     *, _force_tiled: bool = False, _tile=None) -> jax.Array:
    """Pallas equivalent of torch Tensor.transpose(dim0, dim1) for inputs where
    the two swapped axes are the trailing two (the standard ASR case,
    shape=(1, 2) on a (B, T, C) tensor).  Leading axes are flattened into a
    single batch axis (free metadata reshape)."""
    ndim = x.ndim
    d0 = dim0 % ndim
    d1 = dim1 % ndim
    if d0 == d1:
        return x
    lo, hi = sorted((d0, d1))
    assert ndim >= 2 and (lo, hi) == (ndim - 2, ndim - 1), (
        "kernel specialized for swapping the trailing two axes"
    )
    # TODO(synk): arbitrary-axis transposes would need a different relayout
    # kernel (or axis-permutation glue); only the trailing-two-axes hot path
    # is implemented here.

    lead = x.shape[:-2]
    T, C = x.shape[-2], x.shape[-1]
    B = math.prod(lead) if lead else 1
    x3 = x.reshape(B, T, C)

    itemsize = jnp.dtype(x.dtype).itemsize
    out_shape3 = jax.ShapeDtypeStruct((B, C, T), x.dtype)
    slab_bytes = T * C * itemsize
    cost = pl.CostEstimate(flops=0, transcendentals=0,
                           bytes_accessed=2 * B * T * C * itemsize)

    # ---------------- small-slab path: pack batches per grid step -----------
    if not _force_tiled and _tile is None and slab_bytes <= _PER_TILE_BUDGET_BYTES:
        max_nb = min(B, _MAX_PACK,
                     max(1, _PER_TILE_BUDGET_BYTES // max(slab_bytes, 1)))
        # Cap nb so the grid keeps >= _TARGET_STEPS steps when B allows it
        # (pipelining + both v7x TensorCores); ragged last block is masked,
        # so nb need not divide B.
        nb = max(1, min(max_nb, pl.cdiv(B, _TARGET_STEPS)))
        grid_b = pl.cdiv(B, nb)
        # NOTE: output lane density — the output block's trailing dim is T; for
        # the ASR hot path T is normally a 128-multiple frame count, giving
        # unmasked vst.  For T < 128 masked stores are unavoidable without
        # changing semantics (no upstream padding here).
        in_bytes = _padded_block_bytes((nb, T, C), itemsize)
        out_bytes = _padded_block_bytes((nb, C, T), itemsize)
        vmem_limit = min(_VMEM_LIMIT_CAP,
                         max(2 * (in_bytes + out_bytes) + (4 << 20), 16 << 20))
        out3 = pl.pallas_call(
            _make_packed_kernel(nb),
            out_shape=out_shape3,
            grid=(grid_b,),
            in_specs=[pl.BlockSpec((nb, T, C), lambda i: (i, 0, 0))],
            out_specs=pl.BlockSpec((nb, C, T), lambda i: (i, 0, 0)),
            compiler_params=pltpu.CompilerParams(
                dimension_semantics=("parallel",),
                vmem_limit_bytes=vmem_limit),
            cost_estimate=cost,
        )(x3)
        return out3.reshape(*lead, C, T) if lead else out3.reshape(C, T)

    # ---------------- tiled path: grid = (B, T-tiles, C-tiles) --------------
    if _tile is not None:
        tT, tC = _tile
    else:
        tT, tC = _choose_tile(T, C, itemsize, _PER_TILE_BUDGET_BYTES)

    grid = (B, pl.cdiv(T, tT), pl.cdiv(C, tC))
    in_bytes = _padded_block_bytes((tT, tC), itemsize)
    out_bytes = _padded_block_bytes((tC, tT), itemsize)
    vmem_limit = min(_VMEM_LIMIT_CAP,
                     max(2 * (in_bytes + out_bytes) + (4 << 20), 16 << 20))
    out3 = pl.pallas_call(
        _transpose_tile_kernel,
        out_shape=out_shape3,
        grid=grid,
        in_specs=[pl.BlockSpec((pl.Squeezed(), tT, tC),
                               lambda b, ti, ci: (b, ti, ci))],
        out_specs=pl.BlockSpec((pl.Squeezed(), tC, tT),
                               lambda b, ti, ci: (b, ci, ti)),
        compiler_params=pltpu.CompilerParams(
            dimension_semantics=("parallel", "parallel", "parallel"),
            vmem_limit_bytes=vmem_limit),
        cost_estimate=cost,
    )(x3)
    return out3.reshape(*lead, C, T) if lead else out3.reshape(C, T)


class Transpose:
    """Mirror of the PyTorch wrapper: stores the axis pair, applies it in forward."""

    def __init__(self, shape):
        self.shape = shape

    def __call__(self, inputs: jax.Array) -> jax.Array:
        return transpose_pallas(inputs, *self.shape)


if __name__ == "__main__":
    key = jax.random.PRNGKey(0)

    # 1) ASR hot path: (batch, time, channels) -> (batch, channels, time).
    #    Packed path; nb is capped so grid has one step per batch here.
    B, T, C = 2, 16, 32
    x = jax.random.normal(key, (B, T, C), dtype=jnp.float32)
    module = Transpose(shape=(1, 2))
    out = jax.block_until_ready(module(x))
    expected = jnp.swapaxes(x, 1, 2)
    assert out.shape == (B, C, T), out.shape
    assert out.dtype == x.dtype
    assert bool(jnp.array_equal(out, expected))

    # 2) Ragged batch count on the packed path (nb=2, grid=3, last block
    #    masked) with a sub-32-bit dtype.
    key, sub = jax.random.split(key)
    x_r = jax.random.normal(sub, (5, 16, 32), dtype=jnp.float32).astype(jnp.bfloat16)
    out_r = jax.block_until_ready(transpose_pallas(x_r, 1, 2))
    assert out_r.shape == (5, 32, 16)
    assert bool(jnp.array_equal(out_r, jnp.swapaxes(x_r, 1, 2)))

    # 3) Tiled path (forced) with even tiles and ragged edge tiles.
    for shape in [(1, 256, 256), (1, 200, 144)]:
        key, sub = jax.random.split(key)
        x2 = jax.random.normal(sub, shape, dtype=jnp.float32)
        out2 = jax.block_until_ready(
            transpose_pallas(x2, 1, 2, _force_tiled=True, _tile=(128, 128)))
        assert out2.shape == (shape[0], shape[2], shape[1])
        assert bool(jnp.array_equal(out2, jnp.swapaxes(x2, 1, 2)))

    # 4) Tiled path with the auto tile heuristic (full-dim clamped tiles).
    key, sub = jax.random.split(key)
    x3 = jax.random.normal(sub, (2, 192, 160), dtype=jnp.float32)
    out3 = jax.block_until_ready(transpose_pallas(x3, 1, 2, _force_tiled=True))
    assert out3.shape == (2, 160, 192)
    assert bool(jnp.array_equal(out3, jnp.swapaxes(x3, 1, 2)))

    # Sanity-check the tile heuristic budget/burst invariants (no TPU needed).
    for dt in (jnp.float32, jnp.bfloat16, jnp.int8):
        isz = jnp.dtype(dt).itemsize
        tT, tC = _choose_tile(100000, 4096, isz, _PER_TILE_BUDGET_BYTES)
        assert tT * tC * isz <= _PER_TILE_BUDGET_BYTES
        assert tT * isz >= _MIN_BURST_BYTES and tC * isz >= _MIN_BURST_BYTES

    print("KERNEL_OK")
</pallas_src>

<mosaic_0001>
module attributes {stable_mosaic.version = 11 : i64} {
  func.func @kernel(%arg0: i32, %arg1: memref<1x16x32xf32, #tpu.memory_space<vmem>>, %arg2: memref<1x32x16xf32, #tpu.memory_space<vmem>>) attributes {dimension_semantics = [#tpu.dimension_semantics<parallel>], iteration_bounds = array<i64: 2>, scalar_prefetch = 0 : i64, scratch_operands = 0 : i64, tpu.core_type = #tpu.core_type<tc>, window_params = [{transform_indices = @transform_0, window_bounds = array<i64: 1, 16, 32>}, {transform_indices = @transform_1, window_bounds = array<i64: 1, 32, 16>}]} {
    %c0 = arith.constant 0 : index
    %c0_0 = arith.constant 0 : index
    %c0_1 = arith.constant 0 : index
    %0 = vector.load %arg1[%c0, %c0_0, %c0_1] : memref<1x16x32xf32, #tpu.memory_space<vmem>>, vector<1x16x32xf32>
    %1 = vector.shape_cast %0 : vector<1x16x32xf32> to vector<16x32xf32>
    %2 = tpu.transpose %1, [1, 0] : vector<16x32xf32> -> vector<32x16xf32>
    %c0_2 = arith.constant 0 : index
    %c0_3 = arith.constant 0 : index
    %c0_4 = arith.constant 0 : index
    %3 = vector.load %arg2[%c0_2, %c0_3, %c0_4] : memref<1x32x16xf32, #tpu.memory_space<vmem>>, vector<1x32x16xf32>
    %4 = vector.shape_cast %3 : vector<1x32x16xf32> to vector<32x16xf32>
    %5 = vector.shape_cast %2 : vector<32x16xf32> to vector<1x32x16xf32>
    tpu.vector_store %arg2[%c0_2, %c0_3, %c0_4], %5 {strides = array<i32>} : memref<1x32x16xf32, #tpu.memory_space<vmem>>, vector<1x32x16xf32>,
    return
  }
  func.func @transform_0(%arg0: i32) -> (i32, i32, i32) {
    %c0_i32 = arith.constant 0 : i32
    %c0_i32_0 = arith.constant 0 : i32
    %c0_i32_1 = arith.constant 0 : i32
    return %arg0, %c0_i32, %c0_i32_0 : i32, i32, i32
  }
  func.func @transform_1(%arg0: i32) -> (i32, i32, i32) {
    %c0_i32 = arith.constant 0 : i32
    %c0_i32_0 = arith.constant 0 : i32
    %c0_i32_1 = arith.constant 0 : i32
    return %arg0, %c0_i32, %c0_i32_0 : i32, i32, i32
  }
}

</mosaic_0001>

<llo_original>
// kernel: tpu_custom_call.1
$region0: #{tpu_custom_call.1}
  #allocation0 [shape = 'u32[]', space=smem, size = 0x4, offset = 0x4, fixed_abs, tag = 'smem constant byte address 0x4 - core index']
  #allocation1 [shape = 'u32[144,128]{1,0:T(1,128)}', space=vmem, size = 0x12000, scoped, tag = 'internal scratch']
  %s0 = inlined_call_operand.hbm [shape: f32[2,16,32], index: 0, kind: input, shape index: {}]
  %s1 = inlined_call_operand.vmem [shape: f32[2,32,16], index: 1, kind: output, shape index: {}]
  %s2 = sld [smem:[#allocation0]]
  $region41: #{tpu_custom_call.1} parent=0
    _
  %s4 = ssub.s32 1, %s2
  %s5 = scalar_select 0, %s4, %s2
  $region1: #{tpu_custom_call.1} parent=0
    #allocation2 [shape = 'u8[16384]{0}', space=vmem, size = 0x4000, scoped, tag = 'input window, operand 0']
    #allocation3 [shape = 's32[2]{0}', space=sflag, size = 0x8, scoped, tag = 'scoped memory for tpu_custom_call.1']
    %6 = vsyncpa [#allocation3], 0
    %s7 = scalar_lea.sflag [#allocation3], 1
    %8 = vsyncpa %s7, 0
    loop: start=0, step=1, limit=4
    $region2: #{tpu_custom_call.1} parent=1 // loop_pre_header
      _
    $region3: #{tpu_custom_call.1} parent=1 // loop_header
      %s10 = sphi 0, %s14
      %p11 = scmp.ge.s32.totalorder %s10, 4
      %s20 = sphi 0, %s22
      %s23 = sphi 0, %s20
      %s24 = sphi 0, %s23
      %s40 = sphi 0, %s24
      %s46 = sphi 0, %s48
      %s49 = sphi 0, %s46
      %s50 = sphi 0, %s49
      %s66 = sphi 0, %s50
    $region4: #{tpu_custom_call.1} parent=1 // loop_header_branch
      %13 = sbr.rel (%p11) target = $region8
    $region5: #{tpu_custom_call.1} parent=1 // loop_body
      %s15 = ssub.s32 %s10, 1
      %s16 = ssub.s32 %s10, 2
      %s17 = sadd.s32 %s10, 1
      %s18 = ssub.s32 %s10, %s17
      %p19 = scmp.eq.s32.totalorder %s18, 0
      %s21 = sadd.s32 %s20, 1
      %s22 = scalar_select %p19, %s20, %s21
      %p25 = pneg %p19
      %p26 = scmp.eq.s32.totalorder %s10, 1
      %p27 = por %p25, %p26
      %p28 = scmp.ne.s32.totalorder %s20, %s23
      %p29 = scmp.eq.s32.totalorder %s10, 0
      %p30 = por %p28, %p29
      %p31 = scmp.ne.s32.totalorder %s20, %s23
      %p32 = scmp.eq.s32.totalorder %s15, 1
      %p33 = por %p31, %p32
      %p34 = scmp.ne.s32.totalorder %s23, %s24
      %p35 = scmp.eq.s32.totalorder %s15, 0
      %p36 = por %p34, %p35
      %p37 = scmp.ne.s32.totalorder %s23, %s24
      %p38 = scmp.eq.s32.totalorder %s16, 1
      %p39 = por %p37, %p38
      %p41 = scmp.ne.s32.totalorder %s24, %s40
      %p42 = scmp.eq.s32.totalorder %s16, 0
      %p43 = por %p41, %p42
      %s44 = ssub.s32 %s10, %s17
      %p45 = scmp.eq.s32.totalorder %s44, 0
      %s47 = sadd.s32 %s46, 1
      %s48 = scalar_select %p45, %s46, %s47
      %p51 = pneg %p45
      %p52 = scmp.eq.s32.totalorder %s10, 1
      %p53 = por %p51, %p52
      %p54 = scmp.ne.s32.totalorder %s46, %s49
      %p55 = scmp.eq.s32.totalorder %s10, 0
      %p56 = por %p54, %p55
      %p57 = scmp.ne.s32.totalorder %s46, %s49
      %p58 = scmp.eq.s32.totalorder %s15, 1
      %p59 = por %p57, %p58
      %p60 = scmp.ne.s32.totalorder %s49, %s50
      %p61 = scmp.eq.s32.totalorder %s15, 0
      %p62 = por %p60, %p61
      %p63 = scmp.ne.s32.totalorder %s49, %s50
      %p64 = scmp.eq.s32.totalorder %s16, 1
      %p65 = por %p63, %p64
      %p67 = scmp.ne.s32.totalorder %s50, %s66
      %p68 = scmp.eq.s32.totalorder %s16, 0
      %p69 = por %p67, %p68
      %p70 = scmp.le.s32.totalorder 1, %s10
      %p71 = scmp.lt.s32.totalorder %s10, 3
      %p72 = pnand %p70, %p71
      %p73 = pneg %p72
      // Predicated region
      $region9: #{tpu_custom_call.1} parent=5 // pred_check
        _
      $region10: #{tpu_custom_call.1} parent=5 // pred_check_branch
        %75 = sbr.rel (%p72) target = $region12
      $region11: #{tpu_custom_call.1} parent=5 // pred_region
        %s76 = ssub.s32 %s10, 1
      $region12: #{tpu_custom_call.1} parent=5 // pred_fallthru
        _
      %p77 = scmp.lt.s32.totalorder %s10, 2
      // Predicated region
      $region13: #{tpu_custom_call.1} parent=5 // pred_check
        %p78 = pneg %p77
      $region14: #{tpu_custom_call.1} parent=5 // pred_check_branch
        %80 = sbr.rel (%p78) target = $region16
      $region15: #{tpu_custom_call.1} parent=5 // pred_region
        // Predicated region
        $region17: #{tpu_custom_call.1} parent=15 // pred_check
          %p81 = pneg %p30
        $region18: #{tpu_custom_call.1} parent=15 // pred_check_branch
          %83 = sbr.rel (%p81) target = $region20
        $region19: #{tpu_custom_call.1} parent=15 // pred_region
          %s84 = sand.u32 %s20, 1
          %s85 = scalar_lea.sflag [#allocation3], %s84
          %s86 = sand.u32 %s20, 1
          %s87 = smul.addr %s86, 16
          %s88 = scalar_lea.vmem [#allocation2], %s87
          %s90 = ssub.s32 256, 256
          %91 = vsyncadd %s85, %s90
          %s92 = smul.addr %s10, 2
          %s93 = smul.addr %s92, 128
          %s94 = scalar_lea.hbm %s0, %s93
          %s95 = sshll.u32 %s88, 4
          %s96 = int_to_ptr.vmem [resolvable:$true] %s95
          %101 = dma.hbm_to_vmem [thread:$0]  %s94, 256, %s96, %s85, 128, 128, 8
        $region20: #{tpu_custom_call.1} parent=15 // pred_fallthru
          _
      $region16: #{tpu_custom_call.1} parent=5 // pred_fallthru
        _
      %p102 = scmp.le.s32.totalorder 1, %s10
      %p103 = scmp.lt.s32.totalorder %s10, 3
      %p104 = pnand %p102, %p103
      %p105 = pneg %p104
      // Predicated region
      $region21: #{tpu_custom_call.1} parent=5 // pred_check
        _
      $region22: #{tpu_custom_call.1} parent=5 // pred_check_branch
        %107 = sbr.rel (%p104) target = $region24
      $region23: #{tpu_custom_call.1} parent=5 // pred_region
        %s108 = ssub.s32 %s10, 1
        %s109 = sand.u32 %s23, 1
        %s110 = scalar_lea.sflag [#allocation3], %s109
        %s111 = sand.u32 %s23, 1
        %s112 = smul.addr %s111, 16
        %s113 = scalar_lea.vmem [#allocation2], %s112
        // Predicated region
        $region25: #{tpu_custom_call.1} parent=23 // pred_check
          %p114 = pneg %p36
        $region26: #{tpu_custom_call.1} parent=23 // pred_check_branch
          %116 = sbr.rel (%p114) target = $region28
        $region27: #{tpu_custom_call.1} parent=23 // pred_region
          %117 = dma.done %s110, 256
        $region28: #{tpu_custom_call.1} parent=23 // pred_fallthru
          _
        %s118 = sand.u32 %s23, 1
        %s119 = scalar_lea.sflag [#allocation3], %s118
        %s120 = sand.u32 %s23, 1
        %s121 = smul.addr %s120, 16
        %s122 = scalar_lea.vmem [#allocation2], %s121
        %p123 = pneg %p36
        %p124 = pneg %p33
        %p125 = pneg %p62
        %p126 = pneg %p59
        %p127 = scmp.lt.s32.totalorder %s15, 1
        %s128 = scalar_select %p127, %s15, 1
        %s129 = smul.addr %s128, 4
        %s130 = smul.addr %s129, 8
        %s131 = scalar_lea.vmem %s1, %s130
        %p132 = scmp.lt.s32.totalorder %s15, 1
        %s133 = scalar_select %p132, %s15, 1
        %s134 = smul.addr %s133, 4
        %s135 = smul.addr %s134, 8
        %s136 = scalar_lea.vmem %s1, %s135
        %v137 = vld [vmem:[%s113] sm:$0xff]
        %v138 = vld [vmem:[%s113 + $0x8] sm:$0xff]
        %139 = vxpose.xlu0.b32.start [1/16] %v137, 128
        %140 = vxpose.xlu0.b32.cont [2/16] %v138, 128
        %141 = vxpose.xlu0.b32.cont [3/16] 0.0, 128
        %142 = vxpose.xlu0.b32.cont [4/16] 0.0, 128
        %143 = vxpose.xlu0.b32.cont [5/16] 0.0, 128
        %144 = vxpose.xlu0.b32.cont [6/16] 0.0, 128
        %145 = vxpose.xlu0.b32.cont [7/16] 0.0, 128
        %146 = vxpose.xlu0.b32.cont [8/16] 0.0, 128
        %147 = vxpose.xlu0.b32.cont [9/16] 0.0, 128
        %148 = vxpose.xlu0.b32.cont [10/16] 0.0, 128
        %149 = vxpose.xlu0.b32.cont [11/16] 0.0, 128
        %150 = vxpose.xlu0.b32.cont [12/16] 0.0, 128
        %151 = vxpose.xlu0.b32.cont [13/16] 0.0, 128
        %152 = vxpose.xlu0.b32.cont [14/16] 0.0, 128
        %153 = vxpose.xlu0.b32.cont [15/16] 0.0, 128
        %154 = vxpose.xlu0.b32.end [16/16] 0.0, 128
        %v155 = vpop.trf.xlu0
        %v156 = vpop.trf.xlu0
        %v157 = vpop.trf.xlu0
        %v158 = vpop.trf.xlu0
        %v159 = vpop.trf.xlu0
        %v160 = vpop.trf.xlu0
        %v161 = vpop.trf.xlu0
        %v162 = vpop.trf.xlu0
        %v163 = vpop.trf.xlu0
        %v164 = vpop.trf.xlu0
        %v165 = vpop.trf.xlu0
        %v166 = vpop.trf.xlu0
        %v167 = vpop.trf.xlu0
        %v168 = vpop.trf.xlu0
        %v169 = vpop.trf.xlu0
        %v170 = vpop.trf.xlu0
        %vm171 = vcmask 130048
        %172 = vst.msk [vmem:[%s136] sm:$0xff] %vm171, %v155
        %173 = vst.msk [vmem:[%s136 + $0x8] sm:$0xff] %vm171, %v156
        %174 = vst.msk [vmem:[%s136 + $0x10] sm:$0xff] %vm171, %v157
        %175 = vst.msk [vmem:[%s136 + $0x18] sm:$0xff] %vm171, %v158
        %p176 = scmp.lt.s32.totalorder %s15, 1
        %s177 = scalar_select %p176, %s15, 1
        %s178 = smul.addr %s177, 4
        %s179 = smul.addr %s178, 8
        %s180 = scalar_lea.vmem %s1, %s179
        // Predicated region
        $region29: #{tpu_custom_call.1} parent=23 // pred_check
          %p181 = pneg %p59
        $region30: #{tpu_custom_call.1} parent=23 // pred_check_branch
          %183 = sbr.rel (%p181) target = $region32
        $region31: #{tpu_custom_call.1} parent=23 // pred_region
          _
        $region32: #{tpu_custom_call.1} parent=23 // pred_fallthru
          _
      $region24: #{tpu_custom_call.1} parent=5 // pred_fallthru
        _
      %p184 = scmp.le.s32.totalorder 2, %s10
      // Predicated region
      $region33: #{tpu_custom_call.1} parent=5 // pred_check
        %p185 = pneg %p184
      $region34: #{tpu_custom_call.1} parent=5 // pred_check_branch
        %187 = sbr.rel (%p185) target = $region36
      $region35: #{tpu_custom_call.1} parent=5 // pred_region
        %s188 = ssub.s32 %s10, 2
        // Predicated region
        $region37: #{tpu_custom_call.1} parent=35 // pred_check
          %p189 = pneg %p65
        $region38: #{tpu_custom_call.1} parent=35 // pred_check_branch
          %191 = sbr.rel (%p189) target = $region40
        $region39: #{tpu_custom_call.1} parent=35 // pred_region
          %p192 = scmp.lt.s32.totalorder %s16, 1
          %s193 = scalar_select %p192, %s16, 1
          %s194 = smul.addr %s193, 4
          %s195 = smul.addr %s194, 8
          %s196 = scalar_lea.vmem %s1, %s195
        $region40: #{tpu_custom_call.1} parent=35 // pred_fallthru
          _
      $region36: #{tpu_custom_call.1} parent=5 // pred_fallthru
        _
    $region6: #{tpu_custom_call.1} parent=1 // loop_footer
      %s14 = sadd.s32 1, %s10
    $region7: #{tpu_custom_call.1} parent=1 // loop_footer_branch
      %9 = sbr.rel target = $region3
    $region8: #{tpu_custom_call.1} parent=1 // loop_exit
      _
    %197 = vsyncpa [#allocation3], 1
    %s198 = scalar_lea.sflag [#allocation3], 1
    %199 = vsyncpa %s198, 1

</llo_original>
